<compile_context>
chip_gen: v7x
topology: tpu7x:2x2x1
jax: 0.10.0
libtpu: 0.0.40
codegen_flags: <defaults>
</compile_context>

<pallas_src>
import jax
import jax.numpy as jnp
from jax.experimental import pallas as pl
from jax.experimental.pallas import tpu as pltpu


def snake_kernel(x_ref, alpha_ref, o_ref):
    # x_ref:     (R_TILE, T_TILE) tile of the flattened (B*C, T) input.
    # alpha_ref: (R_TILE, 1) per-row alpha (one channel value per row).
    x = x_ref[...].astype(jnp.float32)
    a = alpha_ref[...].astype(jnp.float32)       # (R_TILE, 1)
    inv_a = 1.0 / a                              # hoisted: once per row per tile (exact)
    s = jnp.sin(a * x)                           # EUP transcendental, f32
    o_ref[...] = (x + (s * s) * inv_a).astype(o_ref.dtype)


def snake(x, alpha, *, row_tile=256, time_tile=2048):
    """Snake activation via a Pallas TPU kernel.

    Args:
        x:     (B, C, T) array.
        alpha: (1, C, 1) array (per-channel learnable parameter).
    Returns:
        (B, C, T) array, same dtype as x.
    """
    B, C, T = x.shape
    R = B * C

    # Flatten to rows x time (free for row-major (B, C, T)); tiny per-row alpha.
    x2 = x.reshape(R, T)
    a_rows = jnp.broadcast_to(alpha.reshape(1, C), (B, C)).reshape(R, 1)

    # Row tile: multiple of 8 sublanes, or the full extent when R < 8.
    if R >= 8:
        rt = min(R, row_tile)
        rt -= rt % 8
    else:
        rt = R  # full-extent block is always legal
    # Time tile: multiple of 128 lanes (2048), or the full extent for short T.
    tt = time_tile if T > time_tile else T

    grid = (pl.cdiv(R, rt), pl.cdiv(T, tt))

    out = pl.pallas_call(
        snake_kernel,
        out_shape=jax.ShapeDtypeStruct((R, T), x.dtype),
        grid_spec=pltpu.PrefetchScalarGridSpec(
            num_scalar_prefetch=0,
            grid=grid,
            in_specs=[
                pl.BlockSpec((rt, tt), lambda r, t: (r, t)),
                pl.BlockSpec((rt, 1), lambda r, t: (r, 0)),
            ],
            out_specs=pl.BlockSpec((rt, tt), lambda r, t: (r, t)),
        ),
        compiler_params=pltpu.CompilerParams(
            # Both grid axes are independent -> megacore-shardable on v7x (2 TCs).
            dimension_semantics=("parallel", "parallel"),
            # Headroom for in+out double buffering (~4 * 2 MiB tiles + alpha);
            # safely below v7x's 64 MiB physical VMEM and fine on v5e/v6e.
            vmem_limit_bytes=32 * 1024 * 1024,
        ),
    )(x2, a_rows)

    return out.reshape(B, C, T)


if __name__ == "__main__":
    # Module config (matches Snake.__init__): channels=4, init=50
    B, C, T = 2, 4, 16
    init = 50.0

    key = jax.random.PRNGKey(0)
    x = jax.random.normal(key, (B, C, T), dtype=jnp.float32)
    # Deterministic parameter init, same as `init * torch.ones(1, channels, 1)`
    alpha = init * jnp.ones((1, C, 1), dtype=jnp.float32)

    y = snake(x, alpha)
    y = jax.block_until_ready(y)

    # Reference check in plain JAX (same math as the PyTorch forward)
    y_ref = x + jnp.sin(alpha * x) ** 2 / alpha
    assert y.shape == (B, C, T)
    assert jnp.allclose(y, y_ref, atol=1e-6, rtol=1e-6), float(
        jnp.max(jnp.abs(y - y_ref))
    )

    print("KERNEL_OK")
</pallas_src>

<mosaic_0001>
module attributes {stable_mosaic.version = 11 : i64} {
  func.func @snake_kernel(%arg0: i32, %arg1: i32, %arg2: memref<8x16xf32, #tpu.memory_space<vmem>>, %arg3: memref<8x1xf32, #tpu.memory_space<vmem>>, %arg4: memref<8x16xf32, #tpu.memory_space<vmem>>) attributes {dimension_semantics = [#tpu.dimension_semantics<parallel>, #tpu.dimension_semantics<parallel>], iteration_bounds = array<i64: 1, 1>, scalar_prefetch = 0 : i64, scratch_operands = 0 : i64, tpu.core_type = #tpu.core_type<tc>, window_params = [{transform_indices = @transform_0, window_bounds = array<i64: 8, 16>}, {transform_indices = @transform_1, window_bounds = array<i64: 8, 1>}, {transform_indices = @transform_2, window_bounds = array<i64: 8, 16>}]} {
    %c0 = arith.constant 0 : index
    %c0_0 = arith.constant 0 : index
    %0 = vector.load %arg2[%c0, %c0_0] : memref<8x16xf32, #tpu.memory_space<vmem>>, vector<8x16xf32>
    %c0_1 = arith.constant 0 : index
    %c0_2 = arith.constant 0 : index
    %1 = vector.load %arg3[%c0_1, %c0_2] : memref<8x1xf32, #tpu.memory_space<vmem>>, vector<8x1xf32>
    %cst = arith.constant 1.000000e+00 : f32
    %2 = vector.broadcast %cst : f32 to vector<8x1xf32>
    %3 = arith.divf %2, %1 : vector<8x1xf32>
    %4 = vector.broadcast %1 : vector<8x1xf32> to vector<8x16xf32>
    %5 = arith.mulf %4, %0 : vector<8x16xf32>
    %6 = math.sin %5 : vector<8x16xf32>
    %7 = arith.mulf %6, %6 : vector<8x16xf32>
    %8 = vector.broadcast %3 : vector<8x1xf32> to vector<8x16xf32>
    %9 = arith.mulf %7, %8 : vector<8x16xf32>
    %10 = arith.addf %0, %9 : vector<8x16xf32>
    %c0_3 = arith.constant 0 : index
    %c0_4 = arith.constant 0 : index
    %11 = vector.load %arg4[%c0_3, %c0_4] : memref<8x16xf32, #tpu.memory_space<vmem>>, vector<8x16xf32>
    tpu.vector_store %arg4[%c0_3, %c0_4], %10 {strides = array<i32>} : memref<8x16xf32, #tpu.memory_space<vmem>>, vector<8x16xf32>,
    return
  }
  func.func @transform_0(%arg0: i32, %arg1: i32) -> (i32, i32) {
    %c0_i32 = arith.constant 0 : i32
    return %arg0, %arg1 : i32, i32
  }
  func.func @transform_1(%arg0: i32, %arg1: i32) -> (i32, i32) {
    %c0_i32 = arith.constant 0 : i32
    %c0_i32_0 = arith.constant 0 : i32
    return %arg0, %c0_i32 : i32, i32
  }
  func.func @transform_2(%arg0: i32, %arg1: i32) -> (i32, i32) {
    %c0_i32 = arith.constant 0 : i32
    return %arg0, %arg1 : i32, i32
  }
}

</mosaic_0001>

<llo_original>
// kernel: tpu_custom_call.1
$region0: #{tpu_custom_call.1}
  #allocation0 [shape = 'u32[]', space=smem, size = 0x4, offset = 0x4, fixed_abs, tag = 'smem constant byte address 0x4 - core index']
  #allocation1 [shape = 'u32[144,128]{1,0:T(1,128)}', space=vmem, size = 0x12000, scoped, tag = 'internal scratch']
  %s0 = inlined_call_operand.vmem [shape: f32[8,16], index: 0, kind: input, shape index: {}]
  %s1 = inlined_call_operand.vmem [shape: f32[8,1], index: 1, kind: input, shape index: {}]
  %s2 = inlined_call_operand.hbm [shape: f32[8,16], index: 2, kind: output, shape index: {}]
  %s3 = sld [smem:[#allocation0]]
  $region18: #{tpu_custom_call.1} parent=0
    _
  %s5 = ssub.s32 1, %s3
  %s6 = scalar_select 0, %s5, %s3
  $region1: #{tpu_custom_call.1} parent=0
    #allocation2 [shape = 'u8[4096]{0}', space=vmem, size = 0x1000, scoped, tag = 'output window, operand 0, single buffered']
    #allocation3 [shape = 's32[1]{0}', space=sflag, size = 0x4, scoped, tag = 'scoped memory for tpu_custom_call.1']
    %7 = vsyncpa [#allocation3], 0
    // Predicated region
    $region2: #{tpu_custom_call.1} parent=1 // pred_check
      _
    $region3: #{tpu_custom_call.1} parent=1 // pred_check_branch
      %9 = sbr.rel (0) target = $region5
    $region4: #{tpu_custom_call.1} parent=1 // pred_region
      _
    $region5: #{tpu_custom_call.1} parent=1 // pred_fallthru
      _
    // Predicated region
    $region6: #{tpu_custom_call.1} parent=1 // pred_check
      _
    $region7: #{tpu_custom_call.1} parent=1 // pred_check_branch
      %11 = sbr.rel (0) target = $region9
    $region8: #{tpu_custom_call.1} parent=1 // pred_region
      _
    $region9: #{tpu_custom_call.1} parent=1 // pred_fallthru
      _
    %v12 = vld [vmem:[%s0] sm:$0xff]
    %v13 = vld [vmem:[%s1] sm:$0xff]
    %v14 = vrcp.pop %v13
    %v15 = vmul.f32 1.0, %v14
    %17 = vset.pattern.permute.xlu0 0
    %18 = vperm.xlu0 %17, %v13
    %v19 = vpop.permute.xlu0 %18
    %v21 = vmul.f32 %v19, %v12
    %v22 = vand.u32 2147483647, %v21
    %vm23 = vcmp.le.f32.partialorder %v22, 0.7853982
    %vm24 = vcmp.lt.s32.totalorder %v21, 0
    %v25 = vand.u32 %v21, 2139095040
    %v26 = vshrl.u32 %v25, 23
    %v27 = vsub.s32 %v26, 127
    %v28 = vand.u32 2147483647, %v21
    %v29 = vand.u32 %v28, 8388607
    %v30 = vor.u32 %v29, 8388608
    %v31 = vsub.s32 0, %v30
    %v32 = vadd.s32 %v27, 1
    %vm33 = vcmp.gt.s32.totalorder %v32, 0
    %v34 = vsel %vm33, %v32, 0
    %v35 = vshrl.u32 %v34, 5
    %v36 = vand.u32 %v34, 31
    %v37 = vsub.s32 32, %v36
    %v38 = vshrl.u32 683565275, %v37
    %v39 = vshll.u32 683565275, %v36
    %v40 = vshrl.u32 2475754826, %v37
    %v41 = vor.u32 %v39, %v40
    %v42 = vshll.u32 2475754826, %v36
    %v43 = vshrl.u32 2131351028, %v37
    %v44 = vor.u32 %v42, %v43
    %v45 = vshll.u32 2131351028, %v36
    %v46 = vshrl.u32 2102212464, %v37
    %v47 = vor.u32 %v45, %v46
    %v48 = vshll.u32 2102212464, %v36
    %v49 = vshrl.u32 920167782, %v37
    %v50 = vor.u32 %v48, %v49
    %v51 = vshll.u32 920167782, %v36
    %v52 = vshrl.u32 1326507024, %v37
    %v53 = vor.u32 %v51, %v52
    %vm54 = vcmp.lt.s32.totalorder %v35, 1
    %vm55 = vcmp.lt.s32.totalorder %v35, 2
    %vm56 = vcmp.lt.s32.totalorder %v35, 3
    %vm57 = vcmp.lt.s32.totalorder %v35, 4
    %v58 = vsel %vm54, %v38, %v41
    %v59 = vsel %vm57, %v47, 2102212464
    %v60 = vsel %vm56, %v44, %v59
    %v61 = vsel %vm55, %v58, %v60
    %v62 = vsel %vm54, %v41, %v44
    %v63 = vsel %vm57, %v50, 920167782
    %v64 = vsel %vm56, %v47, %v63
    %v65 = vsel %vm55, %v62, %v64
    %v66 = vsel %vm54, %v44, %v47
    %v67 = vsel %vm57, %v53, 1326507024
    %v68 = vsel %vm56, %v50, %v67
    %v69 = vsel %vm55, %v66, %v68
    %v70 = vshll.u32 %v30, 8
    %v71 = vmul.u32.u64.compose %v70, %v69
    %v72 = vextract.low.u32 %v71
    %v73 = vextract.high.u32 %v71
    %v74 = vmul.u32.u64.compose %v70, %v65
    %v75 = vextract.low.u32 %v74
    %v76 = vextract.high.u32 %v74
    %v77 = vmul.u32 %v70, %v61
    %v78 = vadd.s32 %v73, %v75
    %vm79 = vc.u32 %v73, %v75
    %v80 = vadd.s32 %v76, 1
    %v81 = vsel %vm79, %v80, %v76
    %v82 = vadd.s32 %v77, %v81
    %v83 = vadd.s32 %v82, 536870912
    %v84 = vshrl.u32 %v83, 30
    %v85 = vshll.u32 %v84, 30
    %v86 = vsub.s32 %v82, %v85
    %vm87 = vcmp.lt.s32.totalorder %v86, 0
    %v88 = vsub.s32 0, %v86
    %v89 = vsel %vm87, %v88, %v86
    %v90 = vclz %v89
    %v91 = vsub.s32 %v90, 2
    %vm92 = vcmp.gt.s32.totalorder 0, %v91
    %v93 = vsel %vm92, 0, %v91
    %v94 = vsub.s32 32, %v93
    %v95 = vshll.u32 %v86, %v93
    %v96 = vshrl.u32 %v78, %v94
    %v97 = vor.u32 %v95, %v96
    %v98 = vsub.s32 4294967266, %v93
    %v99 = vadd.s32 %v98, 127
    %v100 = vshll.u32 %v99, 23
    %v101 = vor.u32 4788187, %v100
    %v102 = vand.u32 2147483647, %v101
    %v104 = vcvt.s32.f32 %v97
    %v105 = vmul.f32 %v104, %v102
    %v106 = vxor.u32 %v105, 2147483648
    %v107 = vsel %vm24, %v106, %v105
    %v108 = vsub.s32 4, %v84
    %v109 = vsel %vm24, %v108, %v84
    %v110 = vsel %vm23, %v21, %v107
    %v111 = vsel %vm23, 0, %v109
    %v112 = vcosq.f32.pop %v110
    %v113 = vsinq.f32.pop %v110
    %vm114 = vweird.f32 %v21
    %v115 = vadd.s32 %v111, 3
    %v116 = vand.u32 %v115, 3
    %vm117 = vcmp.lt.s32.totalorder %v116, 2
    %vm118 = vcmp.eq.s32.totalorder %v116, 0
    %v119 = vxor.u32 %v113, 2147483648
    %v120 = vsel %vm118, %v112, %v119
    %vm121 = vcmp.eq.s32.totalorder %v116, 2
    %v122 = vxor.u32 %v112, 2147483648
    %v123 = vsel %vm121, %v122, %v113
    %v124 = vsel %vm117, %v120, %v123
    %v125 = vsel %vm114, nan, %v124
    %v126 = vmul.f32 %v125, %v125
    %128 = vset.pattern.permute.xlu0 0
    %129 = vperm.xlu0 %128, %v15
    %v130 = vpop.permute.xlu0 %129
    %v132 = vmul.f32 %v126, %v130
    %v133 = vadd.f32 %v12, %v132
    %vm134 = vcmask 130048
    %135 = vst.msk [vmem:[#allocation2] sm:$0xff] %vm134, %v133
    // Predicated region
    $region10: #{tpu_custom_call.1} parent=1 // pred_check
      _
    $region11: #{tpu_custom_call.1} parent=1 // pred_check_branch
      %137 = sbr.rel (0) target = $region13
    $region12: #{tpu_custom_call.1} parent=1 // pred_region
      %s139 = ssub.s32 128, 128
      %140 = vsyncadd [#allocation3], %s139
      %s142 = sshll.u32 [#allocation2], 4
      %s143 = int_to_ptr.vmem [resolvable:$true] %s142
      %145 = dma.vmem_to_hbm [thread:$0]  %s143, 128, %s2, [#allocation3]
    $region13: #{tpu_custom_call.1} parent=1 // pred_fallthru
      _
    // Predicated region
    $region14: #{tpu_custom_call.1} parent=1 // pred_check
      _
    $region15: #{tpu_custom_call.1} parent=1 // pred_check_branch
      %147 = sbr.rel (0) target = $region17
    $region16: #{tpu_custom_call.1} parent=1 // pred_region
      %148 = dma.done [#allocation3], 128
    $region17: #{tpu_custom_call.1} parent=1 // pred_fallthru
      _
    %149 = vsyncpa [#allocation3], 1

</llo_original>
